<compile_context>
chip_gen: v6e
topology: v6e:2x2x1
jax: 0.10.0
libtpu: 0.0.40
codegen_flags: <defaults>
</compile_context>

<pallas_src>
import jax
import jax.numpy as jnp
from jax.experimental import pallas as pl
from jax.experimental.pallas import tpu as pltpu

# ---- problem sizes (small, consistent with the module) ----------------------
BATCH = 8          # user_merge is (1, batch, hid_dim); squeeze(0) -> (batch, hid_dim)
HID_DIM = 32
ID_SIZE = 128      # fc_id_out output width; multiple of 128 -> lane-dense stores

_NEG_INF = float("-inf")


def _logits(x_ref, w_ref, b_ref):
    return (
        jnp.dot(
            x_ref[...],
            w_ref[...],
            preferred_element_type=jnp.float32,
            precision=jax.lax.Precision.HIGHEST,
        )
        + b_ref[...]
    )


def _masked_head_kernel(x_ref, w_ref, b_ref, mask_ref, o_ref):
    """Linear + mask_log_softmax in where-form (binary constraint mask)."""
    logits = _logits(x_ref, w_ref, b_ref)
    mask = mask_ref[...]
    valid = mask != 0
    # Row max over valid entries only: masked-out logits can't push valid
    # entries toward exp underflow.  (Shift-invariant, so identical math.)
    m = jnp.max(jnp.where(valid, logits, _NEG_INF), axis=-1, keepdims=True)
    shifted = logits - m
    s = jnp.sum(jnp.exp(shifted) * mask, axis=-1, keepdims=True)
    # log(exp(shifted)*mask / s) == shifted - log(s) where mask==1, -inf else.
    out = jnp.where(valid, shifted - jnp.log(s), _NEG_INF)
    o_ref[...] = out.astype(o_ref.dtype)


def _plain_head_kernel(x_ref, w_ref, b_ref, o_ref):
    """Linear + log_softmax(dim=1)."""
    logits = _logits(x_ref, w_ref, b_ref)
    m = jnp.max(logits, axis=-1, keepdims=True)
    shifted = logits - m
    s = jnp.sum(jnp.exp(shifted), axis=-1, keepdims=True)
    o_ref[...] = (shifted - jnp.log(s)).astype(o_ref.dtype)


def decoder_head(user_merge, fc_w, fc_b, constraint_vec=None, *,
                 dis_prob_mask_flag, block_rows=256):
    """user_merge: (1, rows, H) or (rows, H); fc_w: (H, N) pre-transposed;
    fc_b: (1, N); constraint_vec: (rows, N) when dis_prob_mask_flag.
    Returns (rows, N) log-probabilities."""
    # squeeze(0) / flattening of leading dims is pure layout plumbing.
    x = user_merge.reshape(-1, user_merge.shape[-1])
    rows, H = x.shape
    N = fc_w.shape[1]

    if dis_prob_mask_flag:
        kernel = _masked_head_kernel
        args = (x, fc_w, fc_b, constraint_vec.reshape(rows, N))
    else:
        kernel = _plain_head_kernel
        args = (x, fc_w, fc_b)

    if rows <= block_rows:
        # Single decode step: one invocation, no grid / pipeline machinery.
        vmem = pl.BlockSpec(memory_space=pltpu.MemorySpace.VMEM)
        return pl.pallas_call(
            kernel,
            out_shape=jax.ShapeDtypeStruct((rows, N), x.dtype),
            in_specs=[vmem] * len(args),
            out_specs=vmem,
        )(*args)

    # Many decode rows batched into one pallas_call: tile the rows; weight and
    # bias block index is constant (0, 0) so they are DMA'd once and stay
    # VMEM-resident across the whole grid.
    assert rows % block_rows == 0, "pad rows to a multiple of block_rows"
    grid = (rows // block_rows,)
    in_specs = [
        pl.BlockSpec((block_rows, H), lambda i: (i, 0)),   # x rows
        pl.BlockSpec((H, N), lambda i: (0, 0)),            # fc weight (resident)
        pl.BlockSpec((1, N), lambda i: (0, 0)),            # fc bias   (resident)
    ]
    if dis_prob_mask_flag:
        in_specs.append(pl.BlockSpec((block_rows, N), lambda i: (i, 0)))
    out_spec = pl.BlockSpec((block_rows, N), lambda i: (i, 0))

    return pl.pallas_call(
        kernel,
        out_shape=jax.ShapeDtypeStruct((rows, N), x.dtype),
        grid=grid,
        in_specs=in_specs,
        out_specs=out_spec,
        compiler_params=pltpu.CompilerParams(dimension_semantics=("parallel",)),
    )(*args)


def _reference(x2d, fc_w, fc_b, constraint_vec, dis_prob_mask_flag):
    """Pure-JAX mirror of the PyTorch forward for correctness checking."""
    logits = jnp.dot(x2d, fc_w, precision=jax.lax.Precision.HIGHEST) + fc_b
    m = jnp.max(logits, axis=1, keepdims=True)
    if dis_prob_mask_flag:
        e = jnp.exp(logits - m) * constraint_vec
        s = jnp.sum(e, axis=1, keepdims=True)
        return jnp.log(e / s)
    return jax.nn.log_softmax(logits, axis=1)


def _check_masked(out, ref, mask):
    sup = mask > 0
    # supported entries finite and matching; unsupported entries exactly -inf
    assert bool(jnp.all(jnp.where(sup, jnp.isfinite(out), jnp.isneginf(out))))
    assert bool(jnp.allclose(jnp.where(sup, out, 0.0),
                             jnp.where(sup, ref, 0.0), atol=1e-4, rtol=1e-4))


if __name__ == "__main__":
    import math

    key = jax.random.PRNGKey(0)
    k_x, k_w, k_b, k_m, k_x2, k_m2 = jax.random.split(key, 6)

    bound = 1.0 / math.sqrt(HID_DIM)
    fc_w = jax.random.uniform(k_w, (HID_DIM, ID_SIZE), jnp.float32, -bound, bound)
    fc_b = jax.random.uniform(k_b, (1, ID_SIZE), jnp.float32, -bound, bound)

    # --- single decode step: (1, B, H), gridless path -------------------------
    user_merge = jax.random.normal(k_x, (1, BATCH, HID_DIM), jnp.float32)
    mask = (jax.random.uniform(k_m, (BATCH, ID_SIZE)) < 0.5).astype(jnp.float32)
    mask = mask.at[:, 0].set(1.0)   # every row has at least one reachable id
    x2d = user_merge.reshape(BATCH, HID_DIM)

    out = decoder_head(user_merge, fc_w, fc_b, mask, dis_prob_mask_flag=True)
    jax.block_until_ready(out)
    assert out.shape == (BATCH, ID_SIZE), out.shape
    _check_masked(out, _reference(x2d, fc_w, fc_b, mask, True), mask)

    out2 = decoder_head(user_merge, fc_w, fc_b, dis_prob_mask_flag=False)
    jax.block_until_ready(out2)
    ref2 = _reference(x2d, fc_w, fc_b, mask, False)
    assert bool(jnp.all(jnp.isfinite(out2)))
    assert bool(jnp.allclose(out2, ref2, atol=1e-4, rtol=1e-4))

    # --- batched decode steps: 64 timesteps x B rows in ONE call (grid path) --
    T = 64
    rows = T * BATCH
    xb = jax.random.normal(k_x2, (rows, HID_DIM), jnp.float32)
    maskb = (jax.random.uniform(k_m2, (rows, ID_SIZE)) < 0.5).astype(jnp.float32)
    maskb = maskb.at[:, 0].set(1.0)

    outb = decoder_head(xb, fc_w, fc_b, maskb,
                        dis_prob_mask_flag=True, block_rows=128)
    jax.block_until_ready(outb)
    assert outb.shape == (rows, ID_SIZE), outb.shape
    _check_masked(outb, _reference(xb, fc_w, fc_b, maskb, True), maskb)

    outb2 = decoder_head(xb, fc_w, fc_b,
                         dis_prob_mask_flag=False, block_rows=128)
    jax.block_until_ready(outb2)
    refb2 = _reference(xb, fc_w, fc_b, maskb, False)
    assert bool(jnp.allclose(outb2, refb2, atol=1e-4, rtol=1e-4))

    print("KERNEL_OK")
</pallas_src>

<mosaic_0001>
module attributes {stable_mosaic.version = 11 : i64} {
  func.func @_masked_head_kernel(%arg0: memref<8x32xf32, #tpu.memory_space<vmem>>, %arg1: memref<32x128xf32, #tpu.memory_space<vmem>>, %arg2: memref<1x128xf32, #tpu.memory_space<vmem>>, %arg3: memref<8x128xf32, #tpu.memory_space<vmem>>, %arg4: memref<8x128xf32, #tpu.memory_space<vmem>>) attributes {dimension_semantics = [], scalar_prefetch = 0 : i64, scratch_operands = 0 : i64, tpu.core_type = #tpu.core_type<tc>} {
    %c0 = arith.constant 0 : index
    %c0_0 = arith.constant 0 : index
    %0 = vector.load %arg0[%c0, %c0_0] : memref<8x32xf32, #tpu.memory_space<vmem>>, vector<8x32xf32>
    %c0_1 = arith.constant 0 : index
    %c0_2 = arith.constant 0 : index
    %1 = vector.load %arg1[%c0_1, %c0_2] : memref<32x128xf32, #tpu.memory_space<vmem>>, vector<32x128xf32>
    %cst = arith.constant dense<0.000000e+00> : vector<8x128xf32>
    %2 = tpu.matmul %0, %1, %cst {dimension_numbers = #tpu.dot_dimension_numbers<[1], [0], [0], [1], [0, 0, 1, 1], [], []>, precision = #tpu.contract_precision<fp32>} : vector<8x32xf32>, vector<32x128xf32>, vector<8x128xf32> -> vector<8x128xf32>
    %c0_3 = arith.constant 0 : index
    %c0_4 = arith.constant 0 : index
    %3 = vector.load %arg2[%c0_3, %c0_4] : memref<1x128xf32, #tpu.memory_space<vmem>>, vector<1x128xf32>
    %4 = vector.broadcast %3 : vector<1x128xf32> to vector<8x128xf32>
    %5 = arith.addf %2, %4 : vector<8x128xf32>
    %c0_5 = arith.constant 0 : index
    %c0_6 = arith.constant 0 : index
    %6 = vector.load %arg3[%c0_5, %c0_6] : memref<8x128xf32, #tpu.memory_space<vmem>>, vector<8x128xf32>
    %cst_7 = arith.constant 0.000000e+00 : f32
    %7 = vector.broadcast %cst_7 : f32 to vector<8x128xf32>
    %8 = arith.cmpf one, %6, %7 : vector<8x128xf32>
    %cst_8 = arith.constant 0xFF800000 : f32
    %9 = vector.broadcast %cst_8 : f32 to vector<8x128xf32>
    %10 = arith.select %8, %5, %9 : vector<8x128xi1>, vector<8x128xf32>
    %cst_9 = arith.constant dense<0xFF800000> : vector<8xf32>
    %11 = vector.multi_reduction <maximumf>, %10, %cst_9 [1] : vector<8x128xf32> to vector<8xf32>
    %12 = vector.shape_cast %11 : vector<8xf32> to vector<8x1xf32>
    %13 = vector.broadcast %12 : vector<8x1xf32> to vector<8x128xf32>
    %14 = arith.subf %5, %13 : vector<8x128xf32>
    %15 = math.exp %14 : vector<8x128xf32>
    %16 = arith.mulf %15, %6 : vector<8x128xf32>
    %cst_10 = arith.constant dense<0.000000e+00> : vector<8xf32>
    %17 = vector.multi_reduction <add>, %16, %cst_10 [1] : vector<8x128xf32> to vector<8xf32>
    %18 = vector.shape_cast %17 : vector<8xf32> to vector<8x1xf32>
    %19 = math.log %18 : vector<8x1xf32>
    %20 = vector.broadcast %19 : vector<8x1xf32> to vector<8x128xf32>
    %21 = arith.subf %14, %20 : vector<8x128xf32>
    %cst_11 = arith.constant 0xFF800000 : f32
    %22 = vector.broadcast %cst_11 : f32 to vector<8x128xf32>
    %23 = arith.select %8, %21, %22 : vector<8x128xi1>, vector<8x128xf32>
    %c0_12 = arith.constant 0 : index
    %c0_13 = arith.constant 0 : index
    %24 = vector.load %arg4[%c0_12, %c0_13] : memref<8x128xf32, #tpu.memory_space<vmem>>, vector<8x128xf32>
    tpu.vector_store %arg4[%c0_12, %c0_13], %23 {strides = array<i32>} : memref<8x128xf32, #tpu.memory_space<vmem>>, vector<8x128xf32>,
    return
  }
}

</mosaic_0001>

<llo_original>
// kernel: tpu_custom_call.1
$region0: #{tpu_custom_call.1}
  #allocation0 [shape = 'u32[]', space=smem, size = 0x4, offset = 0x4, fixed_abs, tag = 'smem constant byte address 0x4 - core index']
  #allocation1 [shape = 'u32[144,128]{1,0:T(1,128)}', space=vmem, size = 0x12000, scoped, tag = 'internal scratch']
  %s0 = inlined_call_operand.hbm [shape: f32[8,32], index: 0, kind: input, shape index: {}]
  %s1 = inlined_call_operand.hbm [shape: f32[32,128], index: 1, kind: input, shape index: {}]
  %s2 = inlined_call_operand.vmem [shape: f32[1,128], index: 2, kind: input, shape index: {}]
  %s3 = inlined_call_operand.hbm [shape: f32[8,128], index: 3, kind: input, shape index: {}]
  %s4 = inlined_call_operand.hbm [shape: f32[8,128], index: 4, kind: output, shape index: {}]
  %s5 = sld [smem:[#allocation0]]
  $region38: #{tpu_custom_call.1} parent=0
    _
  %s7 = ssub.s32 1, %s5
  %s8 = scalar_select 0, %s7, %s5
  $region1: #{tpu_custom_call.1} parent=0
    #allocation2 [shape = 'u8[4096]{0}', space=vmem, size = 0x1000, scoped, tag = 'input window, operand 0, single buffered']
    #allocation3 [shape = 's32[1]{0}', space=sflag, size = 0x4, scoped, tag = 'scoped memory for tpu_custom_call.1']
    #allocation4 [shape = 's32[1]{0}', space=sflag, size = 0x4, scoped, tag = 'scoped memory for tpu_custom_call.1']
    #allocation5 [shape = 'u8[16384]{0}', space=vmem, size = 0x4000, scoped, tag = 'input window, operand 1, single buffered']
    #allocation6 [shape = 's32[1]{0}', space=sflag, size = 0x4, scoped, tag = 'scoped memory for tpu_custom_call.1']
    #allocation7 [shape = 'u8[4096]{0}', space=vmem, size = 0x1000, scoped, tag = 'input window, operand 3, single buffered']
    #allocation8 [shape = 'u8[4096]{0}', space=vmem, size = 0x1000, scoped, tag = 'output window, operand 0, single buffered']
    %9 = vsyncpa [#allocation3], 0
    %10 = vsyncpa [#allocation6], 0
    %11 = vsyncpa [#allocation4], 0
    // Predicated region
    $region2: #{tpu_custom_call.1} parent=1 // pred_check
      _
    $region3: #{tpu_custom_call.1} parent=1 // pred_check_branch
      %13 = sbr.rel (0) target = $region5
    $region4: #{tpu_custom_call.1} parent=1 // pred_region
      %s15 = ssub.s32 128, 128
      %16 = vsyncadd [#allocation3], %s15
      %s18 = sshll.u32 [#allocation2], 4
      %s19 = int_to_ptr.vmem [resolvable:$true] %s18
      %21 = dma.hbm_to_vmem [thread:$0]  %s0, 128, %s19, [#allocation3]
    $region5: #{tpu_custom_call.1} parent=1 // pred_fallthru
      _
    // Predicated region
    $region6: #{tpu_custom_call.1} parent=1 // pred_check
      _
    $region7: #{tpu_custom_call.1} parent=1 // pred_check_branch
      %23 = sbr.rel (0) target = $region9
    $region8: #{tpu_custom_call.1} parent=1 // pred_region
      %s25 = ssub.s32 512, 512
      %26 = vsyncadd [#allocation6], %s25
      %s27 = sshll.u32 [#allocation5], 4
      %s28 = int_to_ptr.vmem [resolvable:$true] %s27
      %33 = dma.hbm_to_vmem [thread:$0]  %s1, 512, %s28, [#allocation6], 128, 128, 8
    $region9: #{tpu_custom_call.1} parent=1 // pred_fallthru
      _
    // Predicated region
    $region10: #{tpu_custom_call.1} parent=1 // pred_check
      _
    $region11: #{tpu_custom_call.1} parent=1 // pred_check_branch
      %35 = sbr.rel (0) target = $region13
    $region12: #{tpu_custom_call.1} parent=1 // pred_region
      _
    $region13: #{tpu_custom_call.1} parent=1 // pred_fallthru
      _
    // Predicated region
    $region14: #{tpu_custom_call.1} parent=1 // pred_check
      _
    $region15: #{tpu_custom_call.1} parent=1 // pred_check_branch
      %37 = sbr.rel (0) target = $region17
    $region16: #{tpu_custom_call.1} parent=1 // pred_region
      %s39 = ssub.s32 128, 128
      %40 = vsyncadd [#allocation6], %s39
      %s42 = sshll.u32 [#allocation7], 4
      %s43 = int_to_ptr.vmem [resolvable:$true] %s42
      %45 = dma.hbm_to_vmem [thread:$0]  %s3, 128, %s43, [#allocation6]
    $region17: #{tpu_custom_call.1} parent=1 // pred_fallthru
      _
    // Predicated region
    $region18: #{tpu_custom_call.1} parent=1 // pred_check
      _
    $region19: #{tpu_custom_call.1} parent=1 // pred_check_branch
      %47 = sbr.rel (0) target = $region21
    $region20: #{tpu_custom_call.1} parent=1 // pred_region
      %48 = dma.done [#allocation3], 128
    $region21: #{tpu_custom_call.1} parent=1 // pred_fallthru
      _
    // Predicated region
    $region22: #{tpu_custom_call.1} parent=1 // pred_check
      _
    $region23: #{tpu_custom_call.1} parent=1 // pred_check_branch
      %50 = sbr.rel (0) target = $region25
    $region24: #{tpu_custom_call.1} parent=1 // pred_region
      %51 = dma.done [#allocation6], 512
    $region25: #{tpu_custom_call.1} parent=1 // pred_fallthru
      _
    // Predicated region
    $region26: #{tpu_custom_call.1} parent=1 // pred_check
      _
    $region27: #{tpu_custom_call.1} parent=1 // pred_check_branch
      %53 = sbr.rel (0) target = $region29
    $region28: #{tpu_custom_call.1} parent=1 // pred_region
      %54 = dma.done [#allocation6], 128
    $region29: #{tpu_custom_call.1} parent=1 // pred_fallthru
      _
    %v55 = vld [vmem:[#allocation2] sm:$0xff]
    %v56 = vld [vmem:[#allocation5] sm:$0xff]
    %v57 = vld [vmem:[#allocation5 + $0x8] sm:$0xff]
    %v58 = vld [vmem:[#allocation5 + $0x10] sm:$0xff]
    %v59 = vld [vmem:[#allocation5 + $0x18] sm:$0xff]
    %v60 = vld [vmem:[%s2] sm:$0x1]
    %v62 = vlaneseq
    %v63 = vshrl.u32 %v62, 7
    %v64 = vsub.s32 0, %v63
    %v65 = vrot.slane %v60, %v64
    %vm67 = vcmask 261120
    %v69 = vsel %vm67, %v55, 0
    %71 = vmatprep.subr.mxu0 0.0
    %72 = vmatpush1.msra.mxu0 0.0
    %73 = vmatprep.subr.mxu0 0.0
    %74 = vmatpush1.msra.mxu0 0.0
    %75 = vmatprep.subr.mxu0 0.0
    %76 = vmatpush1.msra.mxu0 0.0
    %77 = vmatprep.subr.mxu0 0.0
    %78 = vmatpush1.msra.mxu0 0.0
    %79 = vmatprep.subr.mxu0 0.0
    %80 = vmatpush1.msra.mxu0 0.0
    %81 = vmatprep.subr.mxu0 0.0
    %82 = vmatpush1.msra.mxu0 0.0
    %83 = vmatprep.subr.mxu0 0.0
    %84 = vmatpush1.msra.mxu0 0.0
    %85 = vmatprep.subr.mxu0 0.0
    %86 = vmatpush1.msra.mxu0 0.0
    %87 = vmatprep.subr.mxu0 0.0
    %88 = vmatpush1.msra.mxu0 0.0
    %89 = vmatprep.subr.mxu0 0.0
    %90 = vmatpush1.msra.mxu0 0.0
    %91 = vmatprep.subr.mxu0 0.0
    %92 = vmatpush1.msra.mxu0 0.0
    %93 = vmatprep.subr.mxu0 0.0
    %94 = vmatpush1.msra.mxu0 0.0
    %95 = vmatprep.subr.mxu0 0.0
    %v96 = vand.u32 %v59, 4294901760
    %97 = vmatpush1.msra.mxu0 %v96
    %98 = vmatprep.subr.mxu0 0.0
    %v99 = vand.u32 %v58, 4294901760
    %100 = vmatpush1.msra.mxu0 %v99
    %101 = vmatprep.subr.mxu0 0.0
    %v102 = vand.u32 %v57, 4294901760
    %103 = vmatpush1.msra.mxu0 %v102
    %104 = vmatprep.subr.mxu0 0.0
    %v105 = vand.u32 %v56, 4294901760
    %106 = vmatpush1.msra.mxu0 %v105
    %107 = vmatprep.subr.mxu0 0.0
    %108 = vmatpush2.msra.mxu0 0.0
    %109 = vmatprep.subr.mxu0 0.0
    %110 = vmatpush2.msra.mxu0 0.0
    %111 = vmatprep.subr.mxu0 0.0
    %112 = vmatpush2.msra.mxu0 0.0
    %113 = vmatprep.subr.mxu0 0.0
    %114 = vmatpush2.msra.mxu0 0.0
    %115 = vmatprep.subr.mxu0 0.0
    %116 = vmatpush2.msra.mxu0 0.0
    %117 = vmatprep.subr.mxu0 0.0
    %118 = vmatpush2.msra.mxu0 0.0
    %119 = vmatprep.subr.mxu0 0.0
    %120 = vmatpush2.msra.mxu0 0.0
    %121 = vmatprep.subr.mxu0 0.0
    %122 = vmatpush2.msra.mxu0 0.0
    %123 = vmatprep.subr.mxu0 0.0
    %124 = vmatpush2.msra.mxu0 0.0
    %125 = vmatprep.subr.mxu0 0.0
    %126 = vmatpush2.msra.mxu0 0.0
    %127 = vmatprep.subr.mxu0 0.0
    %128 = vmatpush2.msra.mxu0 0.0
    %129 = vmatprep.subr.mxu0 0.0
    %130 = vmatpush2.msra.mxu0 0.0
    %131 = vmatprep.subr.mxu0 0.0
    %132 = vmatpush2.msra.mxu0 0.0
    %133 = vmatprep.subr.mxu0 0.0
    %134 = vmatpush2.msra.mxu0 0.0
    %135 = vmatprep.subr.mxu0 0.0
    %136 = vmatpush2.msra.mxu0 0.0
    %137 = vmatprep.subr.mxu0 0.0
    %138 = vmatpush2.msra.mxu0 0.0
    %139 = vmatprep.mubr.f32.mxu0 0.0
    %v140 = vand.u32 %v69, 4294901760
    %v141 = vsub.f32 %v69, %v140
    %v142 = vand.u32 %v141, 4294901760
    %v143 = vsub.f32 %v141, %v142
    %v144 = vand.u32 %v143, 4294901760
    %145 = vmatmul.mubr.f32.gmra.mxu0 %v144
    %v146 = vpop.f32.mrf.mxu0
    %v147 = vadd.f32 %v65, %v146
    %v148 = vpop.f32.mrf.mxu0
    %149 = vdwg.mxu0
    %150 = vmatprep.subr.mxu0 0.0
    %151 = vmatpush1.msra.mxu0 0.0
    %152 = vmatprep.subr.mxu0 0.0
    %153 = vmatpush1.msra.mxu0 0.0
    %154 = vmatprep.subr.mxu0 0.0
    %155 = vmatpush1.msra.mxu0 0.0
    %156 = vmatprep.subr.mxu0 0.0
    %157 = vmatpush1.msra.mxu0 0.0
    %158 = vmatprep.subr.mxu0 0.0
    %159 = vmatpush1.msra.mxu0 0.0
    %160 = vmatprep.subr.mxu0 0.0
    %161 = vmatpush1.msra.mxu0 0.0
    %162 = vmatprep.subr.mxu0 0.0
    %163 = vmatpush1.msra.mxu0 0.0
    %164 = vmatprep.subr.mxu0 0.0
    %165 = vmatpush1.msra.mxu0 0.0
    %166 = vmatprep.subr.mxu0 0.0
    %167 = vmatpush1.msra.mxu0 0.0
    %168 = vmatprep.subr.mxu0 0.0
    %169 = vmatpush1.msra.mxu0 0.0
    %170 = vmatprep.subr.mxu0 0.0
    %171 = vmatpush1.msra.mxu0 0.0
    %172 = vmatprep.subr.mxu0 0.0
    %173 = vmatpush1.msra.mxu0 0.0
    %174 = vmatprep.subr.mxu0 0.0
    %v175 = vand.u32 %v59, 4294901760
    %v176 = vsub.f32 %v59, %v175
    %v177 = vand.u32 %v176, 4294901760
    %v178 = vsub.f32 %v176, %v177
    %v179 = vand.u32 %v178, 4294901760
    %180 = vmatpush1.msra.mxu0 %v179
    %181 = vmatprep.subr.mxu0 0.0
    %v182 = vand.u32 %v58, 4294901760
    %v183 = vsub.f32 %v58, %v182
    %v184 = vand.u32 %v183, 4294901760
    %v185 = vsub.f32 %v183, %v184
    %v186 = vand.u32 %v185, 4294901760
    %187 = vmatpush1.msra.mxu0 %v186
    %188 = vmatprep.subr.mxu0 0.0
    %v189 = vand.u32 %v57, 4294901760
    %v190 = vsub.f32 %v57, %v189
    %v191 = vand.u32 %v190, 4294901760
    %v192 = vsub.f32 %v190, %v191
    %v193 = vand.u32 %v192, 4294901760
    %194 = vmatpush1.msra.mxu0 %v193
    %195 = vmatprep.subr.mxu0 0.0
    %v196 = vand.u32 %v56, 4294901760
    %v197 = vsub.f32 %v56, %v196
    %v198 = vand.u32 %v197, 4294901760
    %v199 = vsub.f32 %v197, %v198
    %v200 = vand.u32 %v199, 4294901760
    %201 = vmatpush1.msra.mxu0 %v200
    %202 = vmatprep.subr.mxu0 0.0
    %203 = vmatpush2.msra.mxu0 0.0
    %204 = vmatprep.subr.mxu0 0.0
    %205 = vmatpush2.msra.mxu0 0.0
    %206 = vmatprep.subr.mxu0 0.0
    %207 = vmatpush2.msra.mxu0 0.0
    %208 = vmatprep.subr.mxu0 0.0
    %209 = vmatpush2.msra.mxu0 0.0
    %210 = vmatprep.subr.mxu0 0.0
    %211 = vmatpush2.msra.mxu0 0.0
    %212 = vmatprep.subr.mxu0 0.0
    %213 = vmatpush2.msra.mxu0 0.0
    %214 = vmatprep.subr.mxu0 0.0
    %215 = vmatpush2.msra.mxu0 0.0
    %216 = vmatprep.subr.mxu0 0.0
    %217 = vmatpush2.msra.mxu0 0.0
    %218 = vmatprep.subr.mxu0 0.0
    %219 = vmatpush2.msra.mxu0 0.0
    %220 = vmatprep.subr.mxu0 0.0
    %221 = vmatpush2.msra.mxu0 0.0
    %222 = vmatprep.subr.mxu0 0.0
    %223 = vmatpush2.msra.mxu0 0.0
    %224 = vmatprep.subr.mxu0 0.0
    %225 = vmatpush2.msra.mxu0 0.0
    %226 = vmatprep.subr.mxu0 0.0
    %227 = vmatpush2.msra.mxu0 0.0
    %228 = vmatprep.subr.mxu0 0.0
    %229 = vmatpush2.msra.mxu0 0.0
    %230 = vmatprep.subr.mxu0 0.0
    %231 = vmatpush2.msra.mxu0 0.0
    %232 = vmatprep.subr.mxu0 0.0
    %233 = vmatpush2.msra.mxu0 0.0
    %234 = vmatprep.mubr.f32.mxu0 0.0
    %v235 = vand.u32 %v69, 4294901760
    %236 = vmatmul.mubr.f32.gmra.mxu0 %v235
    %v237 = vpop.f32.mrf.mxu0
    %v238 = vadd.f32 %v147, %v237
    %v239 = vpop.f32.mrf.mxu0
    %240 = vdwg.mxu0
    %241 = vmatprep.subr.mxu0 0.0
    %242 = vmatpush1.msra.mxu0 0.0
    %243 = vmatprep.subr.mxu0 0.0
    %244 = vmatpush1.msra.mxu0 0.0
    %245 = vmatprep.subr.mxu0 0.0
    %246 = vmatpush1.msra.mxu0 0.0
    %247 = vmatprep.subr.mxu0 0.0
    %248 = vmatpush1.msra.mxu0 0.0
    %249 = vmatprep.subr.mxu0 0.0
    %250 = vmatpush1.msra.mxu0 0.0
    %251 = vmatprep.subr.mxu0 0.0
    %252 = vmatpush1.msra.mxu0 0.0
    %253 = vmatprep.subr.mxu0 0.0
    %254 = vmatpush1.msra.mxu0 0.0
    %255 = vmatprep.subr.mxu0 0.0
    %256 = vmatpush1.msra.mxu0 0.0
    %257 = vmatprep.subr.mxu0 0.0
    %258 = vmatpush1.msra.mxu0 0.0
    %259 = vmatprep.subr.mxu0 0.0
    %260 = vmatpush1.msra.mxu0 0.0
    %261 = vmatprep.subr.mxu0 0.0
    %262 = vmatpush1.msra.mxu0 0.0
    %263 = vmatprep.subr.mxu0 0.0
    %264 = vmatpush1.msra.mxu0 0.0
    %265 = vmatprep.subr.mxu0 0.0
    %v266 = vand.u32 %v59, 4294901760
    %v267 = vsub.f32 %v59, %v266
    %268 = vmatpush1.msra.mxu0 %v267
    %269 = vmatprep.subr.mxu0 0.0
    %v270 = vand.u32 %v58, 4294901760
    %v271 = vsub.f32 %v58, %v270
    %272 = vmatpush1.msra.mxu0 %v271
    %273 = vmatprep.subr.mxu0 0.0
    %v274 = vand.u32 %v57, 4294901760
    %v275 = vsub.f32 %v57, %v274
    %276 = vmatpush1.msra.mxu0 %v275
    %277 = vmatprep.subr.mxu0 0.0
    %v278 = vand.u32 %v56, 4294901760
    %v279 = vsub.f32 %v56, %v278
    %280 = vmatpush1.msra.mxu0 %v279
    %281 = vmatprep.subr.mxu0 0.0
    %282 = vmatpush2.msra.mxu0 0.0
    %283 = vmatprep.subr.mxu0 0.0
    %284 = vmatpush2.msra.mxu0 0.0
    %285 = vmatprep.subr.mxu0 0.0
    %286 = vmatpush2.msra.mxu0 0.0
    %287 = vmatprep.subr.mxu0 0.0
    %288 = vmatpush2.msra.mxu0 0.0
    %289 = vmatprep.subr.mxu0 0.0
    %290 = vmatpush2.msra.mxu0 0.0
    %291 = vmatprep.subr.mxu0 0.0
    %292 = vmatpush2.msra.mxu0 0.0
    %293 = vmatprep.subr.mxu0 0.0
    %294 = vmatpush2.msra.mxu0 0.0
    %295 = vmatprep.subr.mxu0 0.0
    %296 = vmatpush2.msra.mxu0 0.0
    %297 = vmatprep.subr.mxu0 0.0
    %298 = vmatpush2.msra.mxu0 0.0
    %299 = vmatprep.subr.mxu0 0.0
    %300 = vmatpush2.msra.mxu0 0.0
    %301 = vmatprep.subr.mxu0 0.0
    %302 = vmatpush2.msra.mxu0 0.0
    %303 = vmatprep.subr.mxu0 0.0
    %304 = vmatpush2.msra.mxu0 0.0
    %305 = vmatprep.subr.mxu0 0.0
    %306 = vmatpush2.msra.mxu0 0.0
    %307 = vmatprep.subr.mxu0 0.0
    %308 = vmatpush2.msra.mxu0 0.0
    %309 = vmatprep.subr.mxu0 0.0
    %310 = vmatpush2.msra.mxu0 0.0
    %311 = vmatprep.subr.mxu0 0.0
    %312 = vmatpush2.msra.mxu0 0.0
    %313 = vmatprep.mubr.f32.mxu0 0.0
    %v314 = vand.u32 %v69, 4294901760
    %v315 = vsub.f32 %v69, %v314
    %316 = vmatmul.mubr.f32.gmra.mxu0 %v315
    %v317 = vpop.f32.mrf.mxu0
    %v318 = vadd.f32 %v238, %v317
    %v319 = vpop.f32.mrf.mxu0
    %320 = vdwg.mxu0
    %321 = vmatprep.subr.mxu0 0.0
    %322 = vmatpush1.msra.mxu0 0.0
    %323 = vmatprep.subr.mxu0 0.0
    %324 = vmatpush1.msra.mxu0 0.0
    %325 = vmatprep.subr.mxu0 0.0
    %326 = vmatpush1.msra.mxu0 0.0
    %327 = vmatprep.subr.mxu0 0.0
    %328 = vmatpush1.msra.mxu0 0.0
    %329 = vmatprep.subr.mxu0 0.0
    %330 = vmatpush1.msra.mxu0 0.0
    %331 = vmatprep.subr.mxu0 0.0
    %332 = vmatpush1.msra.mxu0 0.0
    %333 = vmatprep.subr.mxu0 0.0
    %334 = vmatpush1.msra.mxu0 0.0
    %335 = vmatprep.subr.mxu0 0.0
    %336 = vmatpush1.msra.mxu0 0.0
    %337 = vmatprep.subr.mxu0 0.0
    %338 = vmatpush1.msra.mxu0 0.0
    %339 = vmatprep.subr.mxu0 0.0
    %340 = vmatpush1.msra.mxu0 0.0
    %341 = vmatprep.subr.mxu0 0.0
    %342 = vmatpush1.msra.mxu0 0.0
    %343 = vmatprep.subr.mxu0 0.0
    %344 = vmatpush1.msra.mxu0 0.0
    %345 = vmatprep.subr.mxu0 0.0
    %v346 = vand.u32 %v59, 4294901760
    %347 = vmatpush1.msra.mxu0 %v346
    %348 = vmatprep.subr.mxu0 0.0
    %v349 = vand.u32 %v58, 4294901760
    %350 = vmatpush1.msra.mxu0 %v349
    %351 = vmatprep.subr.mxu0 0.0
    %v352 = vand.u32 %v57, 4294901760
    %353 = vmatpush1.msra.mxu0 %v352
    %354 = vmatprep.subr.mxu0 0.0
    %v355 = vand.u32 %v56, 4294901760
    %356 = vmatpush1.msra.mxu0 %v355
    %357 = vmatprep.subr.mxu0 0.0
    %358 = vmatpush2.msra.mxu0 0.0
    %359 = vmatprep.subr.mxu0 0.0
    %360 = vmatpush2.msra.mxu0 0.0
    %361 = vmatprep.subr.mxu0 0.0
    %362 = vmatpush2.msra.mxu0 0.0
    %363 = vmatprep.subr.mxu0 0.0
    %364 = vmatpush2.msra.mxu0 0.0
    %365 = vmatprep.subr.mxu0 0.0
    %366 = vmatpush2.msra.mxu0 0.0
    %367 = vmatprep.subr.mxu0 0.0
    %368 = vmatpush2.msra.mxu0 0.0
    %369 = vmatprep.subr.mxu0 0.0
    %370 = vmatpush2.msra.mxu0 0.0
    %371 = vmatprep.subr.mxu0 0.0
    %372 = vmatpush2.msra.mxu0 0.0
    %373 = vmatprep.subr.mxu0 0.0
    %374 = vmatpush2.msra.mxu0 0.0
    %375 = vmatprep.subr.mxu0 0.0
    %376 = vmatpush2.msra.mxu0 0.0
    %377 = vmatprep.subr.mxu0 0.0
    %378 = vmatpush2.msra.mxu0 0.0
    %379 = vmatprep.subr.mxu0 0.0
    %380 = vmatpush2.msra.mxu0 0.0
    %381 = vmatprep.subr.mxu0 0.0
    %382 = vmatpush2.msra.mxu0 0.0
    %383 = vmatprep.subr.mxu0 0.0
    %384 = vmatpush2.msra.mxu0 0.0
    %385 = vmatprep.subr.mxu0 0.0
    %386 = vmatpush2.msra.mxu0 0.0
    %387 = vmatprep.subr.mxu0 0.0
    %388 = vmatpush2.msra.mxu0 0.0
    %389 = vmatprep.mubr.f32.mxu0 0.0
    %v390 = vand.u32 %v69, 4294901760
    %v391 = vsub.f32 %v69, %v390
    %v392 = vand.u32 %v391, 4294901760
    %393 = vmatmul.mubr.f32.gmra.mxu0 %v392
    %v394 = vpop.f32.mrf.mxu0
    %v395 = vadd.f32 %v318, %v394
    %v396 = vpop.f32.mrf.mxu0
    %397 = vdwg.mxu0
    %398 = vmatprep.subr.mxu0 0.0
    %399 = vmatpush1.msra.mxu0 0.0
    %400 = vmatprep.subr.mxu0 0.0
    %401 = vmatpush1.msra.mxu0 0.0
    %402 = vmatprep.subr.mxu0 0.0
    %403 = vmatpush1.msra.mxu0 0.0
    %404 = vmatprep.subr.mxu0 0.0
    %405 = vmatpush1.msra.mxu0 0.0
    %406 = vmatprep.subr.mxu0 0.0
    %407 = vmatpush1.msra.mxu0 0.0
    %408 = vmatprep.subr.mxu0 0.0
    %409 = vmatpush1.msra.mxu0 0.0
    %410 = vmatprep.subr.mxu0 0.0
    %411 = vmatpush1.msra.mxu0 0.0
    %412 = vmatprep.subr.mxu0 0.0
    %413 = vmatpush1.msra.mxu0 0.0
    %414 = vmatprep.subr.mxu0 0.0
    %415 = vmatpush1.msra.mxu0 0.0
    %416 = vmatprep.subr.mxu0 0.0
    %417 = vmatpush1.msra.mxu0 0.0
    %418 = vmatprep.subr.mxu0 0.0
    %419 = vmatpush1.msra.mxu0 0.0
    %420 = vmatprep.subr.mxu0 0.0
    %421 = vmatpush1.msra.mxu0 0.0
    %422 = vmatprep.subr.mxu0 0.0
    %v423 = vand.u32 %v59, 4294901760
    %v424 = vsub.f32 %v59, %v423
    %v425 = vand.u32 %v424, 4294901760
    %426 = vmatpush1.msra.mxu0 %v425
    %427 = vmatprep.subr.mxu0 0.0
    %v428 = vand.u32 %v58, 4294901760
    %v429 = vsub.f32 %v58, %v428
    %v430 = vand.u32 %v429, 4294901760
    %431 = vmatpush1.msra.mxu0 %v430
    %432 = vmatprep.subr.mxu0 0.0
    %v433 = vand.u32 %v57, 4294901760
    %v434 = vsub.f32 %v57, %v433
    %v435 = vand.u32 %v434, 4294901760
    %436 = vmatpush1.msra.mxu0 %v435
    %437 = vmatprep.subr.mxu0 0.0
    %v438 = vand.u32 %v56, 4294901760
    %v439 = vsub.f32 %v56, %v438
    %v440 = vand.u32 %v439, 4294901760
    %441 = vmatpush1.msra.mxu0 %v440
    %442 = vmatprep.subr.mxu0 0.0
    %443 = vmatpush2.msra.mxu0 0.0
    %444 = vmatprep.subr.mxu0 0.0
    %445 = vmatpush2.msra.mxu0 0.0
    %446 = vmatprep.subr.mxu0 0.0
    %447 = vmatpush2.msra.mxu0 0.0
    %448 = vmatprep.subr.mxu0 0.0
    %449 = vmatpush2.msra.mxu0 0.0
    %450 = vmatprep.subr.mxu0 0.0
    %451 = vmatpush2.msra.mxu0 0.0
    %452 = vmatprep.subr.mxu0 0.0
    %453 = vmatpush2.msra.mxu0 0.0
    %454 = vmatprep.subr.mxu0 0.0
    %455 = vmatpush2.msra.mxu0 0.0
    %456 = vmatprep.subr.mxu0 0.0
    %457 = vmatpush2.msra.mxu0 0.0
    %458 = vmatprep.subr.mxu0 0.0
    %459 = vmatpush2.msra.mxu0 0.0
    %460 = vmatprep.subr.mxu0 0.0
    %461 = vmatpush2.msra.mxu0 0.0
    %462 = vmatprep.subr.mxu0 0.0
    %463 = vmatpush2.msra.mxu0 0.0
    %464 = vmatprep.subr.mxu0 0.0
    %465 = vmatpush2.msra.mxu0 0.0
    %466 = vmatprep.subr.mxu0 0.0
    %467 = vmatpush2.msra.mxu0 0.0
    %468 = vmatprep.subr.mxu0 0.0
    %469 = vmatpush2.msra.mxu0 0.0
    %470 = vmatprep.subr.mxu0 0.0
    %471 = vmatpush2.msra.mxu0 0.0
    %472 = vmatprep.subr.mxu0 0.0
    %473 = vmatpush2.msra.mxu0 0.0
    %474 = vmatprep.mubr.f32.mxu0 0.0
    %v475 = vand.u32 %v69, 4294901760
    %476 = vmatmul.mubr.f32.gmra.mxu0 %v475
    %v477 = vpop.f32.mrf.mxu0
    %v478 = vadd.f32 %v395, %v477
    %v479 = vpop.f32.mrf.mxu0
    %480 = vdwg.mxu0
    %481 = vmatprep.subr.mxu0 0.0
    %482 = vmatpush1.msra.mxu0 0.0
    %483 = vmatprep.subr.mxu0 0.0
    %484 = vmatpush1.msra.mxu0 0.0
    %485 = vmatprep.subr.mxu0 0.0
    %486 = vmatpush1.msra.mxu0 0.0
    %487 = vmatprep.subr.mxu0 0.0
    %488 = vmatpush1.msra.mxu0 0.0
    %489 = vmatprep.subr.mxu0 0.0
    %490 = vmatpush1.msra.mxu0 0.0
    %491 = vmatprep.subr.mxu0 0.0
    %492 = vmatpush1.msra.mxu0 0.0
    %493 = vmatprep.subr.mxu0 0.0
    %494 = vmatpush1.msra.mxu0 0.0
    %495 = vmatprep.subr.mxu0 0.0
    %496 = vmatpush1.msra.mxu0 0.0
    %497 = vmatprep.subr.mxu0 0.0
    %498 = vmatpush1.msra.mxu0 0.0
    %499 = vmatprep.subr.mxu0 0.0
    %500 = vmatpush1.msra.mxu0 0.0
    %501 = vmatprep.subr.mxu0 0.0
    %502 = vmatpush1.msra.mxu0 0.0
    %503 = vmatprep.subr.mxu0 0.0
    %504 = vmatpush1.msra.mxu0 0.0
    %505 = vmatprep.subr.mxu0 0.0
    %v506 = vand.u32 %v59, 4294901760
    %507 = vmatpush1.msra.mxu0 %v506
    %508 = vmatprep.subr.mxu0 0.0
    %v509 = vand.u32 %v58, 4294901760
    %510 = vmatpush1.msra.mxu0 %v509
    %511 = vmatprep.subr.mxu0 0.0
    %v512 = vand.u32 %v57, 4294901760
    %513 = vmatpush1.msra.mxu0 %v512
    %514 = vmatprep.subr.mxu0 0.0
    %v515 = vand.u32 %v56, 4294901760
    %516 = vmatpush1.msra.mxu0 %v515
    %517 = vmatprep.subr.mxu0 0.0
    %518 = vmatpush2.msra.mxu0 0.0
    %519 = vmatprep.subr.mxu0 0.0
    %520 = vmatpush2.msra.mxu0 0.0
    %521 = vmatprep.subr.mxu0 0.0
    %522 = vmatpush2.msra.mxu0 0.0
    %523 = vmatprep.subr.mxu0 0.0
    %524 = vmatpush2.msra.mxu0 0.0
    %525 = vmatprep.subr.mxu0 0.0
    %526 = vmatpush2.msra.mxu0 0.0
    %527 = vmatprep.subr.mxu0 0.0
    %528 = vmatpush2.msra.mxu0 0.0
    %529 = vmatprep.subr.mxu0 0.0
    %530 = vmatpush2.msra.mxu0 0.0
    %531 = vmatprep.subr.mxu0 0.0
    %532 = vmatpush2.msra.mxu0 0.0
    %533 = vmatprep.subr.mxu0 0.0
    %534 = vmatpush2.msra.mxu0 0.0
    %535 = vmatprep.subr.mxu0 0.0
    %536 = vmatpush2.msra.mxu0 0.0
    %537 = vmatprep.subr.mxu0 0.0
    %538 = vmatpush2.msra.mxu0 0.0
    %539 = vmatprep.subr.mxu0 0.0
    %540 = vmatpush2.msra.mxu0 0.0
    %541 = vmatprep.subr.mxu0 0.0
    %542 = vmatpush2.msra.mxu0 0.0
    %543 = vmatprep.subr.mxu0 0.0
    %544 = vmatpush2.msra.mxu0 0.0
    %545 = vmatprep.subr.mxu0 0.0
    %546 = vmatpush2.msra.mxu0 0.0
    %547 = vmatprep.subr.mxu0 0.0
    %548 = vmatpush2.msra.mxu0 0.0
    %549 = vmatprep.mubr.f32.mxu0 0.0
    %v550 = vand.u32 %v69, 4294901760
    %551 = vmatmul.mubr.f32.gmra.mxu0 %v550
    %v552 = vpop.f32.mrf.mxu0
    %v553 = vadd.f32 %v478, %v552
    %v554 = vpop.f32.mrf.mxu0
    %555 = vdwg.mxu0
    %v556 = vld [vmem:[#allocation7] sm:$0xff]
    %vm557 = vcmp.ne.f32.partialorder %v556, 0.0
    %v558 = vsel %vm557, %v553, -inf
    %559 = vmax.xlane.f32.xlu0 %v558
    %v560 = vpop.xlane.xlu0 %559
    %v561 = vsub.f32 %v553, %v560
    %v562 = vmul.f32 %v561, 1.442695
    %v563 = vpow.pop %v562
    %v564 = vmul.f32 %v563, %v556
    %565 = vadd.xlane.f32.xlu0 %v564
    %v566 = vpop.xlane.xlu0 %565
    %v567 = vlog2.pop %v566
    %v568 = vmul.f32 %v567, 0.6931472
    %v569 = vsub.f32 %v561, %v568
    %v570 = vsel %vm557, %v569, -inf
    %571 = vst [vmem:[#allocation8] sm:$0xff] %v570
    // Predicated region
    $region30: #{tpu_custom_call.1} parent=1 // pred_check
      _
    $region31: #{tpu_custom_call.1} parent=1 // pred_check_branch
      %573 = sbr.rel (0) target = $region33
    $region32: #{tpu_custom_call.1} parent=1 // pred_region
      %s575 = ssub.s32 128, 128
      %576 = vsyncadd [#allocation4], %s575
      %s578 = sshll.u32 [#allocation8], 4
      %s579 = int_to_ptr.vmem [resolvable:$true] %s578
      %581 = dma.vmem_to_hbm [thread:$0]  %s579, 128, %s4, [#allocation4]
    $region33: #{tpu_custom_call.1} parent=1 // pred_fallthru
      _
    // Predicated region
    $region34: #{tpu_custom_call.1} parent=1 // pred_check
      _
    $region35: #{tpu_custom_call.1} parent=1 // pred_check_branch
      %583 = sbr.rel (0) target = $region37
    $region36: #{tpu_custom_call.1} parent=1 // pred_region
      %584 = dma.done [#allocation4], 128
    $region37: #{tpu_custom_call.1} parent=1 // pred_fallthru
      _
    %585 = vsyncpa [#allocation3], 1
    %586 = vsyncpa [#allocation6], 1
    %587 = vsyncpa [#allocation4], 1

</llo_original>
